<compile_context>
chip_gen: v7x
topology: tpu7x:2x2x1
jax: 0.10.0
libtpu: 0.0.40
codegen_flags: <defaults>
</compile_context>

<pallas_src>
import functools
import numpy as np
import jax
import jax.numpy as jnp
from jax import lax
from jax.experimental import pallas as pl
from jax.experimental.pallas import tpu as pltpu


@functools.lru_cache(maxsize=None)
def _interp_matrix(l_in: int, n_out: int) -> np.ndarray:
    """(l_in, n_out) weights of F.interpolate(mode='linear', align_corners=False)."""
    n = np.arange(n_out)
    src = np.maximum((n + 0.5) * (l_in / n_out) - 0.5, 0.0)
    i0 = np.minimum(np.floor(src).astype(np.int64), l_in - 1)
    i1 = np.minimum(i0 + 1, l_in - 1)
    lam = (src - i0).astype(np.float32)
    w = np.zeros((l_in, n_out), np.float32)
    np.add.at(w, (i0, n), 1.0 - lam)
    np.add.at(w, (i1, n), lam)
    return w


def _vmem_budget_bytes() -> int:
    cap = 64 * 1024 * 1024            # conservative default = v7x physical VMEM
    try:
        cap = int(pltpu.get_tpu_info().vmem_capacity_bytes)
    except Exception:
        pass
    return (cap * 3) // 4             # ~96 MiB on v5e/v6e, ~48 MiB on v7x


def _pos_embed_add_kernel(pe_ref, w_ref, x_ref, out_ref):
    # pe_ref : (1, C, L)   same block every grid step (stays resident in VMEM)
    # w_ref  : (L, TN)     interpolation weights for this N-tile (f32)
    # x_ref  : (TB, C, TN) TB == B when the batch is folded into the block
    # out_ref: (TB, C, TN)
    pe = pe_ref[0].astype(jnp.float32)          # (C, L)
    w = w_ref[...]                              # (L, TN)
    l_in = pe.shape[1]

    if l_in <= 2:
        # Degenerate contraction: one/two broadcast FMAs on the VPU.
        interp = pe[:, 0:1] * w[0:1, :]
        if l_in == 2:
            interp = interp + pe[:, 1:2] * w[1:2, :]
    else:
        # Kernel is HBM-bound, so the MXU slot is idle: do the K=L contraction
        # there and keep the VALU slots for the elementwise add.
        interp = lax.dot_general(pe, w, (((1,), (0,)), ((), ())),
                                 preferred_element_type=jnp.float32)   # (C, TN)

    if x_ref.dtype == jnp.bfloat16 and out_ref.dtype == jnp.bfloat16:
        # bf16 VPU path (v6e/v7x): single down-cast of interp, add in bf16.
        out_ref[...] = x_ref[...] + interp.astype(jnp.bfloat16)[None, :, :]
    else:
        out_ref[...] = (x_ref[...].astype(jnp.float32)
                        + interp[None, :, :]).astype(out_ref.dtype)


def squeeze_axial_pos_embed(x, pos_embed):
    """x: (B, C, N), pos_embed: (1, C, L) -> x + linear_interp(pos_embed, N)."""
    B, C, N = x.shape
    _, C2, L = pos_embed.shape
    assert C == C2, "pos_embed channel dim must match x"

    w = jnp.asarray(_interp_matrix(L, N))       # (L, N), static index math only

    budget = _vmem_budget_bytes()
    x_item = jnp.dtype(x.dtype).itemsize
    pe_item = jnp.dtype(pos_embed.dtype).itemsize

    # ---- tile-size selection (VMEM-budget aware) ----------------------------
    if N < 128:
        # Small sequence: one full-extent lane block (block dim == array dim).
        tn = N
        need = (4 * B * C * tn * x_item        # double-buffered x-in + out
                + 4 * (B + 1) * C * tn         # f32 interp + upcast temp
                + 2 * C * L * pe_item          # resident pos_embed block
                + 8 * L * tn)                  # double-buffered W tile
        fold_b = need <= budget
    else:
        n_cap = (N // 128) * 128               # largest lane-dense tile allowed

        def max_tn(tb):
            per_lane = 4 * tb * C * x_item + 8 * L + 4 * (tb + 1) * C
            fixed = 2 * C * L * pe_item
            t = (budget - fixed) // max(per_lane, 1)
            return min((int(t) // 128) * 128, n_cap)

        tn = max_tn(B)
        fold_b = tn >= 128
        if not fold_b:
            tn = max(128, max_tn(1))           # per-batch grid instead
        if fold_b and tn >= N and N >= 256:
            # Keep >= 2 N-tiles so both v7x TensorCores get work; costs only
            # one extra (~0.35 us) grid step on single-TC chips.
            tn = ((-(-N // 2)) + 127) // 128 * 128

    nb = pl.cdiv(N, tn)

    if fold_b:
        grid = (nb,)
        in_specs = [
            pl.BlockSpec((1, C, L), lambda j: (0, 0, 0)),     # pos_embed (resident)
            pl.BlockSpec((L, tn), lambda j: (0, j)),          # interp weights
            pl.BlockSpec((B, C, tn), lambda j: (0, 0, j)),    # x tile (batch folded)
        ]
        out_spec = pl.BlockSpec((B, C, tn), lambda j: (0, 0, j))
        dims = ("parallel",)
    else:
        grid = (B, nb)
        in_specs = [
            pl.BlockSpec((1, C, L), lambda b, j: (0, 0, 0)),
            pl.BlockSpec((L, tn), lambda b, j: (0, j)),
            pl.BlockSpec((1, C, tn), lambda b, j: (b, 0, j)),
        ]
        out_spec = pl.BlockSpec((1, C, tn), lambda b, j: (b, 0, j))
        dims = ("parallel", "parallel")

    return pl.pallas_call(
        _pos_embed_add_kernel,
        out_shape=jax.ShapeDtypeStruct((B, C, N), x.dtype),
        grid=grid,
        in_specs=in_specs,
        out_specs=out_spec,
        input_output_aliases={2: 0},            # in-place add when x is donated
        compiler_params=pltpu.CompilerParams(
            dimension_semantics=dims,
            vmem_limit_bytes=budget),
    )(pos_embed, w, x)


def reference(x, pos_embed):
    """Pure-JAX reference replicating F.interpolate(mode='linear',
    align_corners=False) via the two-tap gather formula."""
    B, C, N = x.shape
    L = pos_embed.shape[-1]
    scale = L / N
    n = np.arange(N)
    src = np.maximum((n + 0.5) * scale - 0.5, 0.0)
    i0 = np.minimum(np.floor(src).astype(np.int32), L - 1)
    i1 = np.minimum(i0 + 1, L - 1)
    lam1 = jnp.asarray((src - i0).astype(np.float32))
    interp = pos_embed[..., i0] * (1.0 - lam1) + pos_embed[..., i1] * lam1
    return x + interp


if __name__ == "__main__":
    # Small shapes consistent with the module: x (B, C, N), pos_embed (1, C, L).
    B, C, N = 2, 4, 16      # batch=2, dim=4, sequence length=16
    L = 8                   # stored positional-embedding length ('shape' arg)

    key = jax.random.PRNGKey(0)
    kx, kp = jax.random.split(key)
    x = jax.random.normal(kx, (B, C, N), jnp.float32)
    pos_embed = jax.random.normal(kp, (1, C, L), jnp.float32)

    out = squeeze_axial_pos_embed(x, pos_embed)
    out = jax.block_until_ready(out)

    ref = reference(x, pos_embed)
    assert out.shape == (B, C, N) and out.dtype == x.dtype
    max_err = jnp.max(jnp.abs(out - ref))
    assert jnp.allclose(out, ref, atol=1e-5, rtol=1e-5), f"max abs err {max_err}"
    print("KERNEL_OK")
</pallas_src>

<mosaic_0001>
module attributes {stable_mosaic.version = 11 : i64} {
  func.func @_pos_embed_add_kernel(%arg0: i32, %arg1: memref<1x4x8xf32, #tpu.memory_space<vmem>>, %arg2: memref<8x16xf32, #tpu.memory_space<vmem>>, %arg3: memref<2x4x16xf32, #tpu.memory_space<vmem>>, %arg4: memref<2x4x16xf32, #tpu.memory_space<vmem>>) attributes {dimension_semantics = [#tpu.dimension_semantics<parallel>], iteration_bounds = array<i64: 1>, scalar_prefetch = 0 : i64, scratch_operands = 0 : i64, tpu.core_type = #tpu.core_type<tc>, window_params = [{pipeline_mode = #tpu.pipeline_mode<synchronous>, transform_indices = @transform_0, window_bounds = array<i64: 1, 4, 8>}, {transform_indices = @transform_1, window_bounds = array<i64: 8, 16>}, {transform_indices = @transform_2, window_bounds = array<i64: 2, 4, 16>}, {transform_indices = @transform_3, window_bounds = array<i64: 2, 4, 16>}]} {
    %c0 = arith.constant 0 : index
    %c0_0 = arith.constant 0 : index
    %c0_1 = arith.constant 0 : index
    %0 = vector.load %arg1[%c0, %c0_0, %c0_1] : memref<1x4x8xf32, #tpu.memory_space<vmem>>, vector<1x4x8xf32>
    %1 = vector.shape_cast %0 : vector<1x4x8xf32> to vector<4x8xf32>
    %c0_2 = arith.constant 0 : index
    %c0_3 = arith.constant 0 : index
    %2 = vector.load %arg2[%c0_2, %c0_3] : memref<8x16xf32, #tpu.memory_space<vmem>>, vector<8x16xf32>
    %cst = arith.constant dense<0.000000e+00> : vector<4x16xf32>
    %3 = tpu.matmul %1, %2, %cst {dimension_numbers = #tpu.dot_dimension_numbers<[1], [0], [0], [1], [0, 0, 1, 1], [], []>} : vector<4x8xf32>, vector<8x16xf32>, vector<4x16xf32> -> vector<4x16xf32>
    %c0_4 = arith.constant 0 : index
    %c0_5 = arith.constant 0 : index
    %c0_6 = arith.constant 0 : index
    %4 = vector.load %arg3[%c0_4, %c0_5, %c0_6] : memref<2x4x16xf32, #tpu.memory_space<vmem>>, vector<2x4x16xf32>
    %5 = vector.shape_cast %3 : vector<4x16xf32> to vector<1x4x16xf32>
    %6 = vector.broadcast %5 : vector<1x4x16xf32> to vector<2x4x16xf32>
    %7 = arith.addf %4, %6 : vector<2x4x16xf32>
    %c0_7 = arith.constant 0 : index
    %c0_8 = arith.constant 0 : index
    %c0_9 = arith.constant 0 : index
    %8 = vector.load %arg4[%c0_7, %c0_8, %c0_9] : memref<2x4x16xf32, #tpu.memory_space<vmem>>, vector<2x4x16xf32>
    tpu.vector_store %arg4[%c0_7, %c0_8, %c0_9], %7 {strides = array<i32>} : memref<2x4x16xf32, #tpu.memory_space<vmem>>, vector<2x4x16xf32>,
    return
  }
  func.func @transform_0(%arg0: i32) -> (i32, i32, i32) {
    %c0_i32 = arith.constant 0 : i32
    %c0_i32_0 = arith.constant 0 : i32
    %c0_i32_1 = arith.constant 0 : i32
    %c0_i32_2 = arith.constant 0 : i32
    return %c0_i32, %c0_i32_0, %c0_i32_1 : i32, i32, i32
  }
  func.func @transform_1(%arg0: i32) -> (i32, i32) {
    %c0_i32 = arith.constant 0 : i32
    %c0_i32_0 = arith.constant 0 : i32
    return %c0_i32, %arg0 : i32, i32
  }
  func.func @transform_2(%arg0: i32) -> (i32, i32, i32) {
    %c0_i32 = arith.constant 0 : i32
    %c0_i32_0 = arith.constant 0 : i32
    %c0_i32_1 = arith.constant 0 : i32
    return %c0_i32, %c0_i32_0, %arg0 : i32, i32, i32
  }
  func.func @transform_3(%arg0: i32) -> (i32, i32, i32) {
    %c0_i32 = arith.constant 0 : i32
    %c0_i32_0 = arith.constant 0 : i32
    %c0_i32_1 = arith.constant 0 : i32
    return %c0_i32, %c0_i32_0, %arg0 : i32, i32, i32
  }
}

</mosaic_0001>

<llo_original>
// kernel: tpu_custom_call.1
$region0: #{tpu_custom_call.1}
  #allocation0 [shape = 'u32[]', space=smem, size = 0x4, offset = 0x4, fixed_abs, tag = 'smem constant byte address 0x4 - core index']
  #allocation1 [shape = 'u32[144,128]{1,0:T(1,128)}', space=vmem, size = 0x12000, scoped, tag = 'internal scratch']
  %s0 = inlined_call_operand.vmem [shape: f32[1,4,8], index: 0, kind: input, shape index: {}]
  %s1 = inlined_call_operand.vmem [shape: f32[8,16], index: 1, kind: input, shape index: {}]
  %s2 = inlined_call_operand.hbm [shape: f32[2,4,16], index: 2, kind: input, shape index: {}, may-alias: {2,3}]
  %s3 = inlined_call_operand.hbm [shape: f32[2,4,16], index: 3, kind: output, shape index: {}, may-alias: {2,3}]
  %s4 = sld [smem:[#allocation0]]
  $region26: #{tpu_custom_call.1} parent=0
    _
  %s6 = ssub.s32 1, %s4
  %s7 = scalar_select 0, %s6, %s4
  $region1: #{tpu_custom_call.1} parent=0
    #allocation2 [shape = 'u8[4096]{0}', space=vmem, size = 0x1000, scoped, tag = 'input window, operand 2, single buffered']
    #allocation3 [shape = 's32[1]{0}', space=sflag, size = 0x4, scoped, tag = 'scoped memory for tpu_custom_call.1']
    #allocation4 [shape = 's32[1]{0}', space=sflag, size = 0x4, scoped, tag = 'scoped memory for tpu_custom_call.1']
    #allocation5 [shape = 'u8[4096]{0}', space=vmem, size = 0x1000, scoped, tag = 'output window, operand 0, single buffered']
    %8 = vsyncpa [#allocation3], 0
    %9 = vsyncpa [#allocation4], 0
    // Predicated region
    $region2: #{tpu_custom_call.1} parent=1 // pred_check
      _
    $region3: #{tpu_custom_call.1} parent=1 // pred_check_branch
      %11 = sbr.rel (0) target = $region5
    $region4: #{tpu_custom_call.1} parent=1 // pred_region
      _
    $region5: #{tpu_custom_call.1} parent=1 // pred_fallthru
      _
    // Predicated region
    $region6: #{tpu_custom_call.1} parent=1 // pred_check
      _
    $region7: #{tpu_custom_call.1} parent=1 // pred_check_branch
      %13 = sbr.rel (0) target = $region9
    $region8: #{tpu_custom_call.1} parent=1 // pred_region
      _
    $region9: #{tpu_custom_call.1} parent=1 // pred_fallthru
      _
    // Predicated region
    $region10: #{tpu_custom_call.1} parent=1 // pred_check
      _
    $region11: #{tpu_custom_call.1} parent=1 // pred_check_branch
      %15 = sbr.rel (0) target = $region13
    $region12: #{tpu_custom_call.1} parent=1 // pred_region
      %s17 = ssub.s32 128, 128
      %18 = vsyncadd [#allocation3], %s17
      %s19 = sshll.u32 [#allocation2], 4
      %s20 = int_to_ptr.vmem [resolvable:$true] %s19
      %25 = dma.hbm_to_vmem [thread:$0]  %s2, 128, %s20, [#allocation3], 64, 64, 4
    $region13: #{tpu_custom_call.1} parent=1 // pred_fallthru
      _
    // Predicated region
    $region14: #{tpu_custom_call.1} parent=1 // pred_check
      _
    $region15: #{tpu_custom_call.1} parent=1 // pred_check_branch
      %27 = sbr.rel (0) target = $region17
    $region16: #{tpu_custom_call.1} parent=1 // pred_region
      %28 = dma.done [#allocation3], 128
    $region17: #{tpu_custom_call.1} parent=1 // pred_fallthru
      _
    %v29 = vld [vmem:[%s0] sm:$0xf]
    %v30 = vld [vmem:[%s1] sm:$0xff]
    %vm31 = vcmask 64512
    %v33 = vsel %vm31, %v29, 0
    %35 = vmatprep.subr.mxu0 0.0
    %36 = vmatpush1.msra.mxu0 %v30
    %37 = vmatprep.subr.mxu0 0.0
    %38 = vmatpush1.msra.mxu0 0.0
    %39 = vmatprep.subr.mxu0 0.0
    %40 = vmatpush1.msra.mxu0 0.0
    %41 = vmatprep.subr.mxu0 0.0
    %42 = vmatpush1.msra.mxu0 0.0
    %43 = vmatprep.subr.mxu0 0.0
    %44 = vmatpush1.msra.mxu0 0.0
    %45 = vmatprep.subr.mxu0 0.0
    %46 = vmatpush1.msra.mxu0 0.0
    %47 = vmatprep.subr.mxu0 0.0
    %48 = vmatpush1.msra.mxu0 0.0
    %49 = vmatprep.subr.mxu0 0.0
    %50 = vmatpush1.msra.mxu0 0.0
    %51 = vmatprep.subr.mxu0 0.0
    %52 = vmatpush1.msra.mxu0 0.0
    %53 = vmatprep.subr.mxu0 0.0
    %54 = vmatpush1.msra.mxu0 0.0
    %55 = vmatprep.subr.mxu0 0.0
    %56 = vmatpush1.msra.mxu0 0.0
    %57 = vmatprep.subr.mxu0 0.0
    %58 = vmatpush1.msra.mxu0 0.0
    %59 = vmatprep.subr.mxu0 0.0
    %60 = vmatpush1.msra.mxu0 0.0
    %61 = vmatprep.subr.mxu0 0.0
    %62 = vmatpush1.msra.mxu0 0.0
    %63 = vmatprep.subr.mxu0 0.0
    %64 = vmatpush1.msra.mxu0 0.0
    %65 = vmatprep.subr.mxu0 0.0
    %66 = vmatpush1.msra.mxu0 0.0
    %67 = vmatprep.subr.mxu0 0.0
    %68 = vmatpush1.msra.mxu0 0.0
    %69 = vmatprep.subr.mxu0 0.0
    %70 = vmatpush1.msra.mxu0 0.0
    %71 = vmatprep.subr.mxu0 0.0
    %72 = vmatpush1.msra.mxu0 0.0
    %73 = vmatprep.subr.mxu0 0.0
    %74 = vmatpush1.msra.mxu0 0.0
    %75 = vmatprep.subr.mxu0 0.0
    %76 = vmatpush1.msra.mxu0 0.0
    %77 = vmatprep.subr.mxu0 0.0
    %78 = vmatpush1.msra.mxu0 0.0
    %79 = vmatprep.subr.mxu0 0.0
    %80 = vmatpush1.msra.mxu0 0.0
    %81 = vmatprep.subr.mxu0 0.0
    %82 = vmatpush1.msra.mxu0 0.0
    %83 = vmatprep.subr.mxu0 0.0
    %84 = vmatpush1.msra.mxu0 0.0
    %85 = vmatprep.subr.mxu0 0.0
    %86 = vmatpush1.msra.mxu0 0.0
    %87 = vmatprep.subr.mxu0 0.0
    %88 = vmatpush1.msra.mxu0 0.0
    %89 = vmatprep.subr.mxu0 0.0
    %90 = vmatpush1.msra.mxu0 0.0
    %91 = vmatprep.subr.mxu0 0.0
    %92 = vmatpush1.msra.mxu0 0.0
    %93 = vmatprep.subr.mxu0 0.0
    %94 = vmatpush1.msra.mxu0 0.0
    %95 = vmatprep.subr.mxu0 0.0
    %96 = vmatpush1.msra.mxu0 0.0
    %97 = vmatprep.subr.mxu0 0.0
    %98 = vmatpush1.msra.mxu0 0.0
    %99 = vmatprep.mubr.f32.mxu0 0.0
    %100 = vmatmul.mubr.f32.gmra.mrb[0].mxu0 %v33
    %v101 = vpop.f32.mrb[0].mxu0
    %v102 = vadd.f32 0.0, %v101
    %v103 = vpop.f32.mrb[0].mxu0
    %104 = vdwg.mxu0
    %v105 = vld [vmem:[#allocation2] sm:$0xf]
    %v106 = vld [vmem:[#allocation2 + $0x4] sm:$0xf]
    %v107 = vadd.f32 %v105, %v102
    %v108 = vadd.f32 %v106, %v102
    %vm109 = vcmask 125952
    %110 = vst.msk [vmem:[#allocation5] sm:$0xf] %vm109, %v107
    %111 = vst.msk [vmem:[#allocation5 + $0x4] sm:$0xf] %vm109, %v108
    // Predicated region
    $region18: #{tpu_custom_call.1} parent=1 // pred_check
      _
    $region19: #{tpu_custom_call.1} parent=1 // pred_check_branch
      %113 = sbr.rel (0) target = $region21
    $region20: #{tpu_custom_call.1} parent=1 // pred_region
      %s115 = ssub.s32 128, 128
      %116 = vsyncadd [#allocation4], %s115
      %s117 = sshll.u32 [#allocation5], 4
      %s118 = int_to_ptr.vmem [resolvable:$true] %s117
      %123 = dma.vmem_to_hbm [thread:$0]  %s118, 128, %s3, [#allocation4], 64, 64, 4
    $region21: #{tpu_custom_call.1} parent=1 // pred_fallthru
      _
    // Predicated region
    $region22: #{tpu_custom_call.1} parent=1 // pred_check
      _
    $region23: #{tpu_custom_call.1} parent=1 // pred_check_branch
      %125 = sbr.rel (0) target = $region25
    $region24: #{tpu_custom_call.1} parent=1 // pred_region
      %126 = dma.done [#allocation4], 128
    $region25: #{tpu_custom_call.1} parent=1 // pred_fallthru
      _
    %127 = vsyncpa [#allocation3], 1
    %128 = vsyncpa [#allocation4], 1

</llo_original>
